<compile_context>
chip_gen: v6e
topology: v6e:2x2x1
jax: 0.10.0
libtpu: 0.0.40
codegen_flags: <defaults>
</compile_context>

<pallas_src>
import jax
import jax.numpy as jnp
from jax.experimental import pallas as pl
from jax.experimental.pallas import tpu as pltpu

EPS = 1e-8


# --------------------------------------------------------------------------
# Kernels
# --------------------------------------------------------------------------
def adaptive_attention_kernel(x_ref, o_ref):
    """Batch-tiled path: one (TB, N, L) slab per grid step -> (TB, N) weights."""
    x = x_ref[...].astype(jnp.float32)                    # (TB, N, L) f32 accum
    L = x.shape[-1]
    inv_L = 1.0 / L                                       # compile-time scalars
    inv_dof = 1.0 / (L - 1 + EPS)

    # --- TextureComplexity: fused single-pass variance (no diff temporary) ---
    s1 = jnp.sum(x, axis=-1)                              # (TB, N)
    s2 = jnp.sum(x * x, axis=-1)                          # (TB, N)
    sq_sum = jnp.maximum(s2 - s1 * s1 * inv_L, 0.0)       # clamp cancellation
    complexity = jnp.sqrt(sq_sum * inv_dof)               # (TB, N)

    # --- AdaptiveAttention: normalize over the N patches of each batch row ---
    denom = jnp.sum(complexity, axis=-1, keepdims=True) + EPS   # (TB, 1)
    inv = pl.reciprocal(denom, approx=True)               # EUP slot
    inv = inv * (2.0 - denom * inv)                       # 1 Newton step -> f32 accurate
    o_ref[...] = (complexity * inv).astype(o_ref.dtype)


def adaptive_attention_ntiled_kernel(x_ref, o_ref, comp_ref, denom_ref):
    """N-tiled fallback: grid (B, N/TN); complexity resident in VMEM scratch,
    denominator accumulated in SMEM, output written on the last N tile."""
    n = pl.program_id(1)
    tn = x_ref.shape[1]

    @pl.when(n == 0)
    def _():
        denom_ref[0] = jnp.float32(0.0)

    x = x_ref[0].astype(jnp.float32)                      # (TN, L)
    L = x.shape[-1]
    inv_L = 1.0 / L
    inv_dof = 1.0 / (L - 1 + EPS)

    s1 = jnp.sum(x, axis=-1, keepdims=True)               # (TN, 1)
    s2 = jnp.sum(x * x, axis=-1, keepdims=True)           # (TN, 1)
    sq_sum = jnp.maximum(s2 - s1 * s1 * inv_L, 0.0)
    comp = jnp.sqrt(sq_sum * inv_dof)                     # (TN, 1)

    off = pl.multiple_of(n * tn, 8)                       # sublane-aligned store
    comp_ref[pl.ds(off, tn), :] = comp
    denom_ref[0] += jnp.sum(comp)

    @pl.when(n == pl.num_programs(1) - 1)
    def _():
        denom = denom_ref[0] + EPS
        inv = pl.reciprocal(denom, approx=True)
        inv = inv * (2.0 - denom * inv)
        o_ref[0] = (comp_ref[...] * inv).astype(o_ref.dtype)


# --------------------------------------------------------------------------
# Tiling policy
# --------------------------------------------------------------------------
def _vmem_capacity_bytes(default=64 << 20):
    """Physical VMEM per TensorCore; default to the smallest (v7x, 64 MiB)."""
    try:
        cap = int(pltpu.get_tpu_info().vmem_capacity_bytes)
        if cap > 0:
            return cap
    except Exception:
        pass
    return default


def _live_bytes_per_elem(itemsize):
    # double-buffered native input + f32 cast of x + f32 x*x temporary
    return 2 * itemsize + 8


def _choose_tiles(B, N, L, itemsize, block_budget_bytes, min_steps):
    """Returns ("batch", TB) or ("ntiled", TN)."""
    bpe = _live_bytes_per_elem(itemsize)
    row_block_bytes = N * L * bpe                    # one batch row, f32-equivalent
    total_in_bytes = B * N * L * itemsize

    # ---- batch-tiled path: TB must divide B and be sublane-aligned ----------
    tb_candidates = [d for d in range(1, B + 1)
                     if B % d == 0 and (d % 8 == 0 or d == B)]
    fitting = [d for d in tb_candidates if d * row_block_bytes <= block_budget_bytes]
    if fitting:
        if total_in_bytes > (2 << 20):
            # Large input: keep >= min_steps grid steps so the pipeline can hide
            # DMA/writeback and v7x can shard the parallel axis across its TCs.
            stepped = [d for d in fitting if B // d >= min_steps]
            tb = max(stepped) if stepped else min(fitting)
        else:
            # Tiny input: per-step overhead dominates; fewest steps wins.
            tb = max(fitting)
        return "batch", tb

    # ---- N-tiled fallback: single batch row too big (or no aligned divisor) -
    tn_candidates = [d for d in range(1, N + 1)
                     if N % d == 0 and (d % 8 == 0 or d == N)]
    tn_fitting = [d for d in tn_candidates if d * L * bpe <= block_budget_bytes]
    tn = max(tn_fitting) if tn_fitting else min(tn_candidates)
    return "ntiled", tn


# --------------------------------------------------------------------------
# Wrapper
# --------------------------------------------------------------------------
def adaptive_attention(patches: jax.Array, *,
                       block_budget_bytes=None,
                       min_grid_steps: int = 4) -> jax.Array:
    """patches: [B, N, L] (any float dtype) -> attention weights: [B, N]."""
    B, N, L = patches.shape
    itemsize = jnp.dtype(patches.dtype).itemsize

    vmem_cap = _vmem_capacity_bytes()
    if block_budget_bytes is None:
        # ~12 MiB on 128 MiB parts (v5e/v6e), ~10.6 MiB on v7x's 64 MiB.
        block_budget_bytes = min(12 << 20, vmem_cap // 6)

    mode, tile = _choose_tiles(B, N, L, itemsize, block_budget_bytes, min_grid_steps)
    bpe = _live_bytes_per_elem(itemsize)

    cost = pl.CostEstimate(
        flops=4 * B * N * L,                         # x*x, two reduce-adds, fuse-sub
        transcendentals=B * N + B,                   # sqrt per patch + rcp per batch
        bytes_accessed=B * N * L * itemsize + B * N * itemsize,
    )

    if mode == "batch":
        TB = tile
        needed = TB * N * L * bpe + 2 * TB * N * 4 + (1 << 20)
        vmem_limit = int(min(vmem_cap * 3 // 4, max(2 * needed, 32 << 20)))
        return pl.pallas_call(
            adaptive_attention_kernel,
            out_shape=jax.ShapeDtypeStruct((B, N), patches.dtype),
            grid_spec=pltpu.PrefetchScalarGridSpec(
                num_scalar_prefetch=0,
                grid=(B // TB,),
                in_specs=[pl.BlockSpec((TB, N, L), lambda b: (b, 0, 0))],
                out_specs=pl.BlockSpec((TB, N), lambda b: (b, 0)),
            ),
            compiler_params=pltpu.CompilerParams(
                dimension_semantics=("parallel",),
                vmem_limit_bytes=vmem_limit,
            ),
            cost_estimate=cost,
        )(patches)

    # mode == "ntiled": reduction over N tiles per batch row.
    TN = tile
    needed = TN * L * bpe + N * 4 + (1 << 20)
    vmem_limit = int(min(vmem_cap * 3 // 4, max(2 * needed, 32 << 20)))
    out = pl.pallas_call(
        adaptive_attention_ntiled_kernel,
        out_shape=jax.ShapeDtypeStruct((B, N, 1), patches.dtype),
        grid_spec=pltpu.PrefetchScalarGridSpec(
            num_scalar_prefetch=0,
            grid=(B, N // TN),
            in_specs=[pl.BlockSpec((1, TN, L), lambda b, n: (b, n, 0))],
            out_specs=pl.BlockSpec((1, N, 1), lambda b, n: (b, 0, 0)),
            scratch_shapes=[
                pltpu.VMEM((N, 1), jnp.float32),     # per-patch complexity (resident)
                pltpu.SMEM((1,), jnp.float32),       # running denominator
            ],
        ),
        compiler_params=pltpu.CompilerParams(
            dimension_semantics=("parallel", "arbitrary"),
            vmem_limit_bytes=vmem_limit,
        ),
        cost_estimate=cost,
    )(patches)
    return out[..., 0]


# --------------------------------------------------------------------------
# Reference
# --------------------------------------------------------------------------
def adaptive_attention_ref(patches: jax.Array) -> jax.Array:
    """Pure-JAX reference matching the PyTorch module semantics (two-pass var)."""
    L = patches.shape[-1]
    x = patches.astype(jnp.float32)
    patch_mean = jnp.mean(x, axis=-1, keepdims=True)
    complexity = jnp.sqrt(
        jnp.sum((x - patch_mean) ** 2, axis=-1) / (L - 1 + EPS)
    )
    attention = complexity / (jnp.sum(complexity, axis=-1, keepdims=True) + EPS)
    return attention.astype(patches.dtype)


if __name__ == "__main__":
    # Shapes consistent with the module: B batches, N patches, each patch 16x16.
    B, N, P = 2, 8, 16
    L = P * P

    key = jax.random.PRNGKey(0)
    patches = jax.random.normal(key, (B, N, L), dtype=jnp.float32)

    # Default (batch-tiled) path.
    attn = jax.block_until_ready(adaptive_attention(patches))
    ref = adaptive_attention_ref(patches)
    assert attn.shape == (B, N)
    assert jnp.allclose(attn, ref, atol=1e-5, rtol=1e-5), "batch path mismatch vs reference"

    # Exercise the N-tiled fallback path by forcing a tiny per-block budget
    # (so a single (1, N, L) slab "doesn't fit" and the reduction grid kicks in).
    B2, N2 = 2, 16
    patches2 = jax.random.normal(jax.random.PRNGKey(0), (B2, N2, L), dtype=jnp.float32)
    attn2 = jax.block_until_ready(
        adaptive_attention(patches2, block_budget_bytes=48 << 10)
    )
    ref2 = adaptive_attention_ref(patches2)
    assert attn2.shape == (B2, N2)
    assert jnp.allclose(attn2, ref2, atol=1e-5, rtol=1e-5), "n-tiled path mismatch vs reference"

    print("KERNEL_OK")
</pallas_src>

<mosaic_0001>
module attributes {stable_mosaic.version = 11 : i64} {
  func.func @adaptive_attention_kernel(%arg0: i32, %arg1: memref<2x8x256xf32, #tpu.memory_space<vmem>>, %arg2: memref<2x8xf32, #tpu.memory_space<vmem>>) attributes {dimension_semantics = [#tpu.dimension_semantics<parallel>], iteration_bounds = array<i64: 1>, scalar_prefetch = 0 : i64, scratch_operands = 0 : i64, tpu.core_type = #tpu.core_type<tc>, window_params = [{transform_indices = @transform_0, window_bounds = array<i64: 2, 8, 256>}, {transform_indices = @transform_1, window_bounds = array<i64: 2, 8>}]} {
    %c0 = arith.constant 0 : index
    %c0_0 = arith.constant 0 : index
    %c0_1 = arith.constant 0 : index
    %0 = vector.load %arg1[%c0, %c0_0, %c0_1] : memref<2x8x256xf32, #tpu.memory_space<vmem>>, vector<2x8x256xf32>
    %cst = arith.constant dense<0.000000e+00> : vector<2x8xf32>
    %1 = vector.multi_reduction <add>, %0, %cst [2] : vector<2x8x256xf32> to vector<2x8xf32>
    %2 = arith.mulf %0, %0 : vector<2x8x256xf32>
    %cst_2 = arith.constant dense<0.000000e+00> : vector<2x8xf32>
    %3 = vector.multi_reduction <add>, %2, %cst_2 [2] : vector<2x8x256xf32> to vector<2x8xf32>
    %4 = arith.mulf %1, %1 : vector<2x8xf32>
    %cst_3 = arith.constant 3.906250e-03 : f32
    %5 = vector.broadcast %cst_3 : f32 to vector<2x8xf32>
    %6 = arith.mulf %4, %5 : vector<2x8xf32>
    %7 = arith.subf %3, %6 : vector<2x8xf32>
    %cst_4 = arith.constant 0.000000e+00 : f32
    %8 = vector.broadcast %cst_4 : f32 to vector<2x8xf32>
    %9 = arith.maximumf %7, %8 : vector<2x8xf32>
    %cst_5 = arith.constant 0.00392156886 : f32
    %10 = vector.broadcast %cst_5 : f32 to vector<2x8xf32>
    %11 = arith.mulf %9, %10 : vector<2x8xf32>
    %12 = math.sqrt %11 : vector<2x8xf32>
    %cst_6 = arith.constant dense<0.000000e+00> : vector<2xf32>
    %13 = vector.multi_reduction <add>, %12, %cst_6 [1] : vector<2x8xf32> to vector<2xf32>
    %14 = vector.shape_cast %13 : vector<2xf32> to vector<2x1xf32>
    %cst_7 = arith.constant 9.99999993E-9 : f32
    %15 = vector.broadcast %cst_7 : f32 to vector<2x1xf32>
    %16 = arith.addf %14, %15 : vector<2x1xf32>
    %17 = tpu.reciprocal %16 {approx = true} : vector<2x1xf32> -> vector<2x1xf32>
    %18 = arith.mulf %16, %17 : vector<2x1xf32>
    %cst_8 = arith.constant 2.000000e+00 : f32
    %19 = vector.broadcast %cst_8 : f32 to vector<2x1xf32>
    %20 = arith.subf %19, %18 : vector<2x1xf32>
    %21 = arith.mulf %17, %20 : vector<2x1xf32>
    %22 = vector.broadcast %21 : vector<2x1xf32> to vector<2x8xf32>
    %23 = arith.mulf %12, %22 : vector<2x8xf32>
    %c0_9 = arith.constant 0 : index
    %c0_10 = arith.constant 0 : index
    %24 = vector.load %arg2[%c0_9, %c0_10] : memref<2x8xf32, #tpu.memory_space<vmem>>, vector<2x8xf32>
    tpu.vector_store %arg2[%c0_9, %c0_10], %23 {strides = array<i32>} : memref<2x8xf32, #tpu.memory_space<vmem>>, vector<2x8xf32>,
    return
  }
  func.func @transform_0(%arg0: i32) -> (i32, i32, i32) {
    %c0_i32 = arith.constant 0 : i32
    %c0_i32_0 = arith.constant 0 : i32
    %c0_i32_1 = arith.constant 0 : i32
    return %arg0, %c0_i32, %c0_i32_0 : i32, i32, i32
  }
  func.func @transform_1(%arg0: i32) -> (i32, i32) {
    %c0_i32 = arith.constant 0 : i32
    %c0_i32_0 = arith.constant 0 : i32
    return %arg0, %c0_i32 : i32, i32
  }
}

</mosaic_0001>

<llo_original>
// kernel: tpu_custom_call.1
$region0: #{tpu_custom_call.1}
  #allocation0 [shape = 'u32[]', space=smem, size = 0x4, offset = 0x4, fixed_abs, tag = 'smem constant byte address 0x4 - core index']
  #allocation1 [shape = 'u32[144,128]{1,0:T(1,128)}', space=vmem, size = 0x12000, scoped, tag = 'internal scratch']
  %s0 = inlined_call_operand.hbm [shape: f32[2,8,256], index: 0, kind: input, shape index: {}]
  %s1 = inlined_call_operand.hbm [shape: f32[2,8], index: 1, kind: output, shape index: {}]
  %s2 = sld [smem:[#allocation0]]
  $region18: #{tpu_custom_call.1} parent=0
    _
  %s4 = ssub.s32 1, %s2
  %s5 = scalar_select 0, %s4, %s2
  $region1: #{tpu_custom_call.1} parent=0
    #allocation2 [shape = 'u8[16384]{0}', space=vmem, size = 0x4000, scoped, tag = 'input window, operand 0, single buffered']
    #allocation3 [shape = 's32[1]{0}', space=sflag, size = 0x4, scoped, tag = 'scoped memory for tpu_custom_call.1']
    #allocation4 [shape = 's32[1]{0}', space=sflag, size = 0x4, scoped, tag = 'scoped memory for tpu_custom_call.1']
    #allocation5 [shape = 'u8[1024]{0}', space=vmem, size = 0x400, scoped, tag = 'output window, operand 0, single buffered']
    %6 = vsyncpa [#allocation3], 0
    %7 = vsyncpa [#allocation4], 0
    // Predicated region
    $region2: #{tpu_custom_call.1} parent=1 // pred_check
      _
    $region3: #{tpu_custom_call.1} parent=1 // pred_check_branch
      %9 = sbr.rel (0) target = $region5
    $region4: #{tpu_custom_call.1} parent=1 // pred_region
      %s11 = ssub.s32 512, 512
      %12 = vsyncadd [#allocation3], %s11
      %s13 = sshll.u32 [#allocation2], 4
      %s14 = int_to_ptr.vmem [resolvable:$true] %s13
      %19 = dma.hbm_to_vmem [thread:$0]  %s0, 512, %s14, [#allocation3], 256, 256, 16
    $region5: #{tpu_custom_call.1} parent=1 // pred_fallthru
      _
    // Predicated region
    $region6: #{tpu_custom_call.1} parent=1 // pred_check
      _
    $region7: #{tpu_custom_call.1} parent=1 // pred_check_branch
      %21 = sbr.rel (0) target = $region9
    $region8: #{tpu_custom_call.1} parent=1 // pred_region
      %22 = dma.done [#allocation3], 512
    $region9: #{tpu_custom_call.1} parent=1 // pred_fallthru
      _
    %v23 = vld [vmem:[#allocation2] sm:$0xff]
    %v24 = vld [vmem:[#allocation2 + $0x8] sm:$0xff]
    %v25 = vld [vmem:[#allocation2 + $0x10] sm:$0xff]
    %v26 = vld [vmem:[#allocation2 + $0x18] sm:$0xff]
    %v27 = vadd.f32 %v23, %v24
    %28 = vadd.xlane.f32.xlu0 %v27
    %v29 = vpop.xlane.xlu0 %28
    %v30 = vadd.f32 %v25, %v26
    %31 = vadd.xlane.f32.xlu0 %v30
    %v32 = vpop.xlane.xlu0 %31
    %v33 = vmul.f32 %v23, %v23
    %v34 = vmul.f32 %v24, %v24
    %v35 = vmul.f32 %v25, %v25
    %v36 = vmul.f32 %v26, %v26
    %v37 = vadd.f32 %v33, %v34
    %38 = vadd.xlane.f32.xlu0 %v37
    %v39 = vpop.xlane.xlu0 %38
    %v40 = vadd.f32 %v35, %v36
    %41 = vadd.xlane.f32.xlu0 %v40
    %v42 = vpop.xlane.xlu0 %41
    %v43 = vmul.f32 %v29, %v29
    %v44 = vmul.f32 %v32, %v32
    %v45 = vmul.f32 %v43, 0.00390625
    %v46 = vmul.f32 %v44, 0.00390625
    %v47 = vsub.f32 %v39, %v45
    %v48 = vsub.f32 %v42, %v46
    %v49 = vmax.f32 %v47, 0.0
    %v50 = vmax.f32 %v48, 0.0
    %v51 = vmul.f32 %v49, 0.003921569
    %v52 = vmul.f32 %v50, 0.003921569
    %v53 = vrsqrt.pop %v51
    %v54 = vmul.f32 %v51, %v53
    %vm55 = vcmp.eq.f32.partialorder %v51, inf
    %v56 = vsel %vm55, %v51, %v54
    %vm57 = vcmp.eq.f32.partialorder %v51, 0.0
    %v58 = vand.u32 %v51, 2147483648
    %v59 = vsel %vm57, %v58, %v56
    %v60 = vrsqrt.pop %v52
    %v61 = vmul.f32 %v52, %v60
    %vm62 = vcmp.eq.f32.partialorder %v52, inf
    %v63 = vsel %vm62, %v52, %v61
    %vm64 = vcmp.eq.f32.partialorder %v52, 0.0
    %v65 = vand.u32 %v52, 2147483648
    %v66 = vsel %vm64, %v65, %v63
    %v69 = vlaneseq
    %v70 = vand.u32 %v69, 127
    %v71 = vlaneseq
    %v72 = vshrl.u32 %v71, 7
    %v73 = vsub.s32 %v70, %v72
    %v74 = vrot.slane %v59, %v73
    %v75 = vlaneseq
    %v76 = vshrl.u32 %v75, 7
    %v77 = vsub.s32 %v70, %v76
    %v78 = vrot.slane %v66, %v77
    %vm79 = vcmask 1041409
    %v80 = vsel %vm79, %v78, %v74
    %vm82 = vcmask 58368
    %v83 = vsel %vm82, %v80, 0.0
    %84 = vadd.xlane.f32.xlu0 %v83
    %v85 = vpop.xlane.xlu0 %84
    %v86 = vadd.f32 %v85, 1e-08
    %v87 = vrcp.pop %v86
    %v88 = vmul.f32 %v86, %v87
    %v89 = vsub.f32 2.0, %v88
    %v90 = vmul.f32 %v87, %v89
    %v92 = vlaneseq
    %v93 = vshrl.u32 %v92, 7
    %v94 = vsub.s32 0, %v93
    %v95 = vrot.slane %v90, %v94
    %v96 = vlaneseq
    %v97 = vshrl.u32 %v96, 7
    %v98 = vsub.s32 1, %v97
    %v99 = vrot.slane %v90, %v98
    %v102 = vmul.f32 %v59, %v95
    %v103 = vmul.f32 %v66, %v99
    %106 = vset.pattern.permute.xlu0 0
    %107 = vperm.xlu0 %106, %v102
    %v108 = vpop.permute.xlu0 %107
    %109 = vset.pattern.permute.xlu0 0
    %110 = vperm.xlu0 %109, %v103
    %v111 = vpop.permute.xlu0 %110
    %v112 = vlaneseq
    %v113 = vshrl.u32 %v112, 7
    %v114 = vsub.s32 %v70, %v113
    %v115 = vrot.slane %v108, %v114
    %v116 = vlaneseq
    %v117 = vshrl.u32 %v116, 7
    %v118 = vsub.s32 %v70, %v117
    %v119 = vrot.slane %v111, %v118
    %v120 = vsel %vm79, %v119, %v115
    %122 = vst.msk [vmem:[#allocation5] sm:$0x3] %vm82, %v120
    // Predicated region
    $region10: #{tpu_custom_call.1} parent=1 // pred_check
      _
    $region11: #{tpu_custom_call.1} parent=1 // pred_check_branch
      %124 = sbr.rel (0) target = $region13
    $region12: #{tpu_custom_call.1} parent=1 // pred_region
      %s126 = ssub.s32 32, 32
      %127 = vsyncadd [#allocation4], %s126
      %s129 = sshll.u32 [#allocation5], 4
      %s130 = int_to_ptr.vmem [resolvable:$true] %s129
      %132 = dma.vmem_to_hbm [thread:$0]  %s130, 32, %s1, [#allocation4]
    $region13: #{tpu_custom_call.1} parent=1 // pred_fallthru
      _
    // Predicated region
    $region14: #{tpu_custom_call.1} parent=1 // pred_check
      _
    $region15: #{tpu_custom_call.1} parent=1 // pred_check_branch
      %134 = sbr.rel (0) target = $region17
    $region16: #{tpu_custom_call.1} parent=1 // pred_region
      %135 = dma.done [#allocation4], 32
    $region17: #{tpu_custom_call.1} parent=1 // pred_fallthru
      _
    %136 = vsyncpa [#allocation3], 1
    %137 = vsyncpa [#allocation4], 1

</llo_original>
